<compile_context>
chip_gen: v5e
topology: v5e:2x2
jax: 0.10.0
libtpu: 0.0.40
codegen_flags: <defaults>
</compile_context>

<pallas_src>
import functools
import math

import jax
import jax.numpy as jnp
from jax.experimental import pallas as pl
from jax.experimental.pallas import tpu as pltpu

LN_EPS = 1e-5


@functools.lru_cache(maxsize=1)
def _vmem_limit_bytes():
    """Scoped-VMEM limit: generous, but with headroom below physical capacity."""
    cap = 64 * 1024 * 1024
    try:
        info = pltpu.get_tpu_info()
        cap = int(getattr(info, "vmem_capacity_bytes", cap))
    except Exception:  # non-TPU trace / older runtime: fall back to the v7x-safe value
        pass
    # v7x (64 MiB physical) -> ~52 MiB; v5e/v6e (128 MiB) -> 100 MiB.
    return int(max(32 * 1024 * 1024, min(cap - 12 * 1024 * 1024, 100 * 1024 * 1024)))


def _row_tile(m):
    """Largest tile in {512..8} that divides m and yields >=2 grid steps; else whole m."""
    for c in (512, 256, 128, 64, 32, 16, 8):
        if m % c == 0 and m // c >= 2:
            return c
    return m


# ---------------------------------------------------------------------------
# Embedding LayerNorm kernel (row-tiled, bf16 output for the encoder stack)
# ---------------------------------------------------------------------------
def _ln_kernel(x_ref, g_ref, b_ref, o_ref, *, eps):
    x = x_ref[...].astype(jnp.float32)
    mu = jnp.mean(x, axis=-1, keepdims=True)
    xc = x - mu
    var = jnp.mean(xc * xc, axis=-1, keepdims=True)
    o_ref[...] = (xc * jax.lax.rsqrt(var + eps) * g_ref[...] + b_ref[...]).astype(o_ref.dtype)


def layernorm(x, gamma, beta, eps=LN_EPS):
    M, H = x.shape
    tm = _row_tile(M)
    return pl.pallas_call(
        functools.partial(_ln_kernel, eps=eps),
        grid=(M // tm,),
        in_specs=[
            pl.BlockSpec((tm, H), lambda i: (i, 0)),
            pl.BlockSpec((1, H), lambda i: (0, 0)),
            pl.BlockSpec((1, H), lambda i: (0, 0)),
        ],
        out_specs=pl.BlockSpec((tm, H), lambda i: (i, 0)),
        out_shape=jax.ShapeDtypeStruct((M, H), jnp.bfloat16),
        compiler_params=pltpu.CompilerParams(
            dimension_semantics=("parallel",),
            vmem_limit_bytes=_vmem_limit_bytes()),
    )(x, gamma, beta)


# ---------------------------------------------------------------------------
# Fused encoder layer kernel: attention block + FFN block in one pallas_call
# ---------------------------------------------------------------------------
def _layer_kernel(x_ref, mask_ref, wqkv_ref, bqkv_ref, wo_ref, bo_ref,
                  g1_ref, beta1_ref, w1_ref, b1_ref, w2_ref, b2_ref,
                  g2_ref, beta2_ref, o_ref, ctx_ref, *, n_heads, eps):
    x_bf = x_ref[0]                                # (S, H) bf16, VMEM-resident
    S, H = x_bf.shape
    dH = H // n_heads
    mask = mask_ref[0]                             # (1, S) additive mask, broadcasts over rows

    # QKV projection. Attention scale is already folded into the Q columns of wqkv.
    # Bias-add fused with the bf16 cast: no f32 (S, 3H) kept live through the head loop.
    qkv_bf = (jnp.dot(x_bf, wqkv_ref[...], preferred_element_type=jnp.float32)
              + bqkv_ref[...]).astype(jnp.bfloat16)                         # (S, 3H)

    # Static per-head loop; each head writes its context into the (S, H) bf16 scratch at its
    # lane offset, so temporaries die per head and the output projection is a single K=H matmul.
    # TODO(synk): if the bundle dump shows lane-rotate copies for the dH-wide (non-128-aligned)
    #             slices, process two heads per iteration from a 128-lane-aligned slice.
    for h in range(n_heads):
        q = qkv_bf[:, h * dH:(h + 1) * dH]
        k = qkv_bf[:, H + h * dH:H + (h + 1) * dH]
        v = qkv_bf[:, 2 * H + h * dH:2 * H + (h + 1) * dH]
        s = jax.lax.dot_general(q, k, (((1,), (1,)), ((), ())),
                                preferred_element_type=jnp.float32) + mask   # (S, S) f32
        s = s - jnp.max(s, axis=-1, keepdims=True)
        p = jnp.exp(s)
        p = p * pl.reciprocal(jnp.sum(p, axis=-1, keepdims=True), approx=True)
        ctx_ref[:, h * dH:(h + 1) * dH] = jnp.dot(
            p.astype(jnp.bfloat16), v,
            preferred_element_type=jnp.float32).astype(jnp.bfloat16)

    # Single full-depth output projection over the concatenated heads.
    attn = jnp.dot(ctx_ref[...], wo_ref[...], preferred_element_type=jnp.float32)
    y = attn + bo_ref[...] + x_bf.astype(jnp.float32)            # residual (f32)
    mu = jnp.mean(y, axis=-1, keepdims=True)
    yc = y - mu
    var = jnp.mean(yc * yc, axis=-1, keepdims=True)
    y1 = yc * jax.lax.rsqrt(var + eps) * g1_ref[...] + beta1_ref[...]       # LN1, (S, H) f32

    # FFN block, consuming the LN1 result directly from VMEM (no HBM round trip).
    h1 = jnp.dot(y1.astype(jnp.bfloat16), w1_ref[...],
                 preferred_element_type=jnp.float32) + b1_ref[...]
    # TODO(synk): HF RoBERTa uses exact erf GELU; tanh approximation used here (EUP path).
    h1 = jax.nn.gelu(h1, approximate=True)
    y2 = jnp.dot(h1.astype(jnp.bfloat16), w2_ref[...],
                 preferred_element_type=jnp.float32) + b2_ref[...]
    y2 = y2 + y1                                                  # residual (f32)
    mu2 = jnp.mean(y2, axis=-1, keepdims=True)
    y2c = y2 - mu2
    var2 = jnp.mean(y2c * y2c, axis=-1, keepdims=True)
    o_ref[0] = (y2c * jax.lax.rsqrt(var2 + eps) * g2_ref[...] + beta2_ref[...]).astype(o_ref.dtype)


def encoder_layer(x3, add_mask, lyr, *, n_heads, eps=LN_EPS):
    B, S, H = x3.shape
    F = lyr["w1"].shape[1]

    flops = B * (8 * S * H * H + 4 * S * S * H + 4 * S * H * F)
    transcendentals = B * (n_heads * S * S + S * F)
    bytes_accessed = (2 * 2 * B * S * H                        # bf16 activations in + out
                      + 2 * (3 * H * H + H * H + 2 * H * F)    # bf16 weights
                      + 4 * (B * S + 3 * H + F + 6 * H))       # f32 mask / biases / LN params
    ce = pl.CostEstimate(flops=int(flops), transcendentals=int(transcendentals),
                         bytes_accessed=int(bytes_accessed))

    # TODO(synk): on v7x, single-buffer the grid-invariant weight blocks
    #             (pipeline_mode=pl.Buffered(1)) and/or store wqkv/w1/w2 in fp8 with
    #             per-channel scales to fit comfortably in the 64 MiB VMEM budget.
    # TODO(synk): for very long sequences, add a query-tile grid axis (flash-style) to bound
    #             the (S, S) score intermediate.
    return pl.pallas_call(
        functools.partial(_layer_kernel, n_heads=n_heads, eps=eps),
        grid=(B,),
        in_specs=[
            pl.BlockSpec((1, S, H), lambda b: (b, 0, 0)),      # x (bf16)
            pl.BlockSpec((1, 1, S), lambda b: (b, 0, 0)),      # additive mask (f32)
            pl.BlockSpec((H, 3 * H), lambda b: (0, 0)),        # wqkv (bf16, scale folded in Q)
            pl.BlockSpec((1, 3 * H), lambda b: (0, 0)),        # bqkv
            pl.BlockSpec((H, H), lambda b: (0, 0)),            # wo
            pl.BlockSpec((1, H), lambda b: (0, 0)),            # bo
            pl.BlockSpec((1, H), lambda b: (0, 0)),            # ln1 gamma
            pl.BlockSpec((1, H), lambda b: (0, 0)),            # ln1 beta
            pl.BlockSpec((H, F), lambda b: (0, 0)),            # w1
            pl.BlockSpec((1, F), lambda b: (0, 0)),            # b1
            pl.BlockSpec((F, H), lambda b: (0, 0)),            # w2
            pl.BlockSpec((1, H), lambda b: (0, 0)),            # b2
            pl.BlockSpec((1, H), lambda b: (0, 0)),            # ln2 gamma
            pl.BlockSpec((1, H), lambda b: (0, 0)),            # ln2 beta
        ],
        out_specs=pl.BlockSpec((1, S, H), lambda b: (b, 0, 0)),
        out_shape=jax.ShapeDtypeStruct((B, S, H), jnp.bfloat16),
        scratch_shapes=[pltpu.VMEM((S, H), jnp.bfloat16)],     # per-head context slab
        compiler_params=pltpu.CompilerParams(
            dimension_semantics=("parallel",),
            vmem_limit_bytes=_vmem_limit_bytes()),
        cost_estimate=ce,
    )(x3, add_mask, lyr["wqkv"], lyr["bqkv"], lyr["wo"], lyr["bo"],
      lyr["ln1_g"], lyr["ln1_b"], lyr["w1"], lyr["b1"], lyr["w2"], lyr["b2"],
      lyr["ln2_g"], lyr["ln2_b"])


# ---------------------------------------------------------------------------
# Parameter init (deterministic, synthetic — no checkpoint load)
# ---------------------------------------------------------------------------
def init_params(key, *, vocab, hidden, n_layers, n_heads, ffn, max_pos, num_ans, num_eq):
    q_scale = 1.0 / math.sqrt(hidden // n_heads)

    def nrm(k, shape):
        return 0.02 * jax.random.normal(k, shape, jnp.float32)

    keys = iter(jax.random.split(key, 4 + 4 * n_layers))
    params = {
        "word_emb": nrm(next(keys), (vocab, hidden)),
        "pos_emb": nrm(next(keys), (max_pos, hidden)),
        "type_emb": nrm(next(keys), (1, hidden)),
        "emb_ln_g": jnp.ones((1, hidden), jnp.float32),
        "emb_ln_b": jnp.zeros((1, hidden), jnp.float32),
        # ans_head / eq_head fused into one (H, num_ans + num_eq) projection (plain jnp).
        "head_w": nrm(next(keys), (hidden, num_ans + num_eq)),
        "head_b": jnp.zeros((1, num_ans + num_eq), jnp.float32),
        "layers": [],
    }
    for _ in range(n_layers):
        wqkv = nrm(next(keys), (hidden, 3 * hidden))
        # Fold the 1/sqrt(dH) attention scale into the Q columns (q bias is zero; nothing to fold).
        wqkv = wqkv.at[:, :hidden].multiply(q_scale)
        params["layers"].append({
            "wqkv": wqkv.astype(jnp.bfloat16),
            "bqkv": jnp.zeros((1, 3 * hidden), jnp.float32),
            "wo": nrm(next(keys), (hidden, hidden)).astype(jnp.bfloat16),
            "bo": jnp.zeros((1, hidden), jnp.float32),
            "ln1_g": jnp.ones((1, hidden), jnp.float32),
            "ln1_b": jnp.zeros((1, hidden), jnp.float32),
            "w1": nrm(next(keys), (hidden, ffn)).astype(jnp.bfloat16),
            "b1": jnp.zeros((1, ffn), jnp.float32),
            "w2": nrm(next(keys), (ffn, hidden)).astype(jnp.bfloat16),
            "b2": jnp.zeros((1, hidden), jnp.float32),
            "ln2_g": jnp.ones((1, hidden), jnp.float32),
            "ln2_b": jnp.zeros((1, hidden), jnp.float32),
        })
    return params


# ---------------------------------------------------------------------------
# Forward pass (mirrors RobertaDualClass.forward)
# ---------------------------------------------------------------------------
def roberta_dual_forward(params, input_ids, attention_mask, *, n_heads, num_ans):
    B, S = input_ids.shape
    hidden = params["word_emb"].shape[1]
    mask_f = attention_mask.astype(jnp.float32)

    # ---- embeddings (index gathers are glue; LN runs in a Pallas kernel) ----
    # NOTE: max_pos must be >= S + 2 because of RoBERTa's padding_idx=1 offset.
    pos_ids = (jnp.cumsum(attention_mask.astype(jnp.int32), axis=1)
               * attention_mask.astype(jnp.int32)) + 1
    emb = (jnp.take(params["word_emb"], input_ids, axis=0)
           + jnp.take(params["pos_emb"], pos_ids, axis=0)
           + params["type_emb"][0][None, None, :])
    x = layernorm(emb.reshape(B * S, hidden), params["emb_ln_g"], params["emb_ln_b"])  # bf16

    # additive attention mask shared by all heads inside the fused layer kernel: (B, 1, S)
    add_mask = ((1.0 - mask_f)[:, None, :] * (-1e9)).astype(jnp.float32)

    x3 = x.reshape(B, S, hidden)
    for lyr in params["layers"]:
        x3 = encoder_layer(x3, add_mask, lyr, n_heads=n_heads)   # fused attn + LN1 + FFN + LN2

    cls_vec = x3[:, 0, :].astype(jnp.float32)                    # out.last_hidden_state[:, 0, :]
    # TODO(synk): nn.Dropout(0.2) is identity at inference; training-mode RNG dropout not applied.
    # Dual heads fused into one tiny (B,H)@(H, num_ans+num_eq) matmul — plain jnp (see review).
    logits = jnp.dot(cls_vec, params["head_w"]) + params["head_b"][0]
    return logits[:, :num_ans], logits[:, num_ans:]


# ---------------------------------------------------------------------------
if __name__ == "__main__":
    B, S = 2, 8
    vocab, hidden, n_layers, n_heads, ffn, max_pos = 100, 32, 2, 4, 64, 40
    num_ans, num_eq = 5, 7

    key = jax.random.PRNGKey(0)
    pkey, ikey = jax.random.split(key)
    params = init_params(pkey, vocab=vocab, hidden=hidden, n_layers=n_layers,
                         n_heads=n_heads, ffn=ffn, max_pos=max_pos,
                         num_ans=num_ans, num_eq=num_eq)

    input_ids = jax.random.randint(ikey, (B, S), 2, vocab, dtype=jnp.int32)
    attention_mask = jnp.ones((B, S), jnp.int32).at[1, 6:].set(0)  # pad tail of seq 1

    ans_logits, eq_logits = roberta_dual_forward(
        params, input_ids, attention_mask, n_heads=n_heads, num_ans=num_ans)
    jax.block_until_ready((ans_logits, eq_logits))

    assert ans_logits.shape == (B, num_ans) and ans_logits.dtype == jnp.float32
    assert eq_logits.shape == (B, num_eq) and eq_logits.dtype == jnp.float32
    assert bool(jnp.all(jnp.isfinite(ans_logits))) and bool(jnp.all(jnp.isfinite(eq_logits)))
    print("KERNEL_OK")
</pallas_src>

<mosaic_0001>
module attributes {stable_mosaic.version = 11 : i64} {
  func.func @_ln_kernel(%arg0: i32, %arg1: memref<8x32xf32, #tpu.memory_space<vmem>>, %arg2: memref<1x32xf32, #tpu.memory_space<vmem>>, %arg3: memref<1x32xf32, #tpu.memory_space<vmem>>, %arg4: memref<8x32xbf16, #tpu.memory_space<vmem>>) attributes {dimension_semantics = [#tpu.dimension_semantics<parallel>], iteration_bounds = array<i64: 2>, scalar_prefetch = 0 : i64, scratch_operands = 0 : i64, tpu.core_type = #tpu.core_type<tc>, window_params = [{transform_indices = @transform_0, window_bounds = array<i64: 8, 32>}, {pipeline_mode = #tpu.pipeline_mode<synchronous>, transform_indices = @transform_1, window_bounds = array<i64: 1, 32>}, {pipeline_mode = #tpu.pipeline_mode<synchronous>, transform_indices = @transform_2, window_bounds = array<i64: 1, 32>}, {transform_indices = @transform_3, window_bounds = array<i64: 8, 32>}]} {
    %c0 = arith.constant 0 : index
    %c0_0 = arith.constant 0 : index
    %0 = vector.load %arg1[%c0, %c0_0] : memref<8x32xf32, #tpu.memory_space<vmem>>, vector<8x32xf32>
    %cst = arith.constant dense<0.000000e+00> : vector<8xf32>
    %1 = vector.multi_reduction <add>, %0, %cst [1] : vector<8x32xf32> to vector<8xf32>
    %2 = vector.shape_cast %1 : vector<8xf32> to vector<8x1xf32>
    %cst_1 = arith.constant 3.200000e+01 : f32
    %3 = vector.broadcast %cst_1 : f32 to vector<8x1xf32>
    %4 = arith.divf %2, %3 : vector<8x1xf32>
    %5 = vector.broadcast %4 : vector<8x1xf32> to vector<8x32xf32>
    %6 = arith.subf %0, %5 : vector<8x32xf32>
    %7 = arith.mulf %6, %6 : vector<8x32xf32>
    %cst_2 = arith.constant dense<0.000000e+00> : vector<8xf32>
    %8 = vector.multi_reduction <add>, %7, %cst_2 [1] : vector<8x32xf32> to vector<8xf32>
    %9 = vector.shape_cast %8 : vector<8xf32> to vector<8x1xf32>
    %cst_3 = arith.constant 3.200000e+01 : f32
    %10 = vector.broadcast %cst_3 : f32 to vector<8x1xf32>
    %11 = arith.divf %9, %10 : vector<8x1xf32>
    %cst_4 = arith.constant 9.99999974E-6 : f32
    %12 = vector.broadcast %cst_4 : f32 to vector<8x1xf32>
    %13 = arith.addf %11, %12 : vector<8x1xf32>
    %14 = math.rsqrt %13 : vector<8x1xf32>
    %15 = vector.broadcast %14 : vector<8x1xf32> to vector<8x32xf32>
    %16 = arith.mulf %6, %15 : vector<8x32xf32>
    %c0_5 = arith.constant 0 : index
    %c0_6 = arith.constant 0 : index
    %17 = vector.load %arg2[%c0_5, %c0_6] : memref<1x32xf32, #tpu.memory_space<vmem>>, vector<1x32xf32>
    %18 = vector.broadcast %17 : vector<1x32xf32> to vector<8x32xf32>
    %19 = arith.mulf %16, %18 : vector<8x32xf32>
    %c0_7 = arith.constant 0 : index
    %c0_8 = arith.constant 0 : index
    %20 = vector.load %arg3[%c0_7, %c0_8] : memref<1x32xf32, #tpu.memory_space<vmem>>, vector<1x32xf32>
    %21 = vector.broadcast %20 : vector<1x32xf32> to vector<8x32xf32>
    %22 = arith.addf %19, %21 : vector<8x32xf32>
    %23 = arith.truncf %22 : vector<8x32xf32> to vector<8x32xbf16>
    %c0_9 = arith.constant 0 : index
    %c0_10 = arith.constant 0 : index
    %24 = vector.load %arg4[%c0_9, %c0_10] : memref<8x32xbf16, #tpu.memory_space<vmem>>, vector<8x32xbf16>
    tpu.vector_store %arg4[%c0_9, %c0_10], %23 {strides = array<i32>} : memref<8x32xbf16, #tpu.memory_space<vmem>>, vector<8x32xbf16>,
    return
  }
  func.func @transform_0(%arg0: i32) -> (i32, i32) {
    %c0_i32 = arith.constant 0 : i32
    %c0_i32_0 = arith.constant 0 : i32
    return %arg0, %c0_i32 : i32, i32
  }
  func.func @transform_1(%arg0: i32) -> (i32, i32) {
    %c0_i32 = arith.constant 0 : i32
    %c0_i32_0 = arith.constant 0 : i32
    %c0_i32_1 = arith.constant 0 : i32
    return %c0_i32, %c0_i32_0 : i32, i32
  }
  func.func @transform_2(%arg0: i32) -> (i32, i32) {
    %c0_i32 = arith.constant 0 : i32
    %c0_i32_0 = arith.constant 0 : i32
    %c0_i32_1 = arith.constant 0 : i32
    return %c0_i32, %c0_i32_0 : i32, i32
  }
  func.func @transform_3(%arg0: i32) -> (i32, i32) {
    %c0_i32 = arith.constant 0 : i32
    %c0_i32_0 = arith.constant 0 : i32
    return %arg0, %c0_i32 : i32, i32
  }
}

</mosaic_0001>

<llo_original>
// kernel: tpu_custom_call.1
$region0: #{tpu_custom_call.1}
  #allocation0 [shape = 'u32[]', space=smem, size = 0x4, offset = 0x4, fixed_abs, tag = 'smem constant byte address 0x4 - core index']
  #allocation1 [shape = 'u32[72,128]{1,0:T(1,128)}', space=vmem, size = 0x9000, scoped, tag = 'internal scratch']
  %s0 = inlined_call_operand.hbm [shape: f32[16,32], index: 0, kind: input, shape index: {}]
  %s1 = inlined_call_operand.hbm [shape: f32[1,32], index: 1, kind: input, shape index: {}]
  %s2 = inlined_call_operand.vmem [shape: f32[1,32], index: 2, kind: input, shape index: {}]
  %s3 = inlined_call_operand.hbm [shape: bf16[16,32], index: 3, kind: output, shape index: {}]
  %s4 = sld [smem:[#allocation0]]
  $region53: #{tpu_custom_call.1} parent=0
    _
  %s6 = ssub.s32 1, %s4
  %s7 = scalar_select 0, %s6, %s4
  $region1: #{tpu_custom_call.1} parent=0
    #allocation2 [shape = 'u8[8192]{0}', space=vmem, size = 0x2000, scoped, tag = 'input window, operand 0']
    #allocation3 [shape = 's32[2]{0}', space=sflag, size = 0x8, scoped, tag = 'scoped memory for tpu_custom_call.1']
    #allocation4 [shape = 's32[2]{0}', space=sflag, size = 0x8, scoped, tag = 'scoped memory for tpu_custom_call.1']
    #allocation5 [shape = 'u8[512]{0}', space=vmem, size = 0x400, scoped, tag = 'input window, operand 1, single buffered']
    #allocation6 [shape = 's32[1]{0}', space=sflag, size = 0x4, scoped, tag = 'scoped memory for tpu_custom_call.1']
    #allocation7 [shape = 'u8[4096]{0}', space=vmem, size = 0x1000, scoped, tag = 'output window, operand 0']
    %8 = vsyncpa [#allocation3], 0
    %s9 = scalar_lea.sflag [#allocation3], 1
    %10 = vsyncpa %s9, 0
    %11 = vsyncpa [#allocation6], 0
    %12 = vsyncpa [#allocation4], 0
    %s13 = scalar_lea.sflag [#allocation4], 1
    %14 = vsyncpa %s13, 0
    loop: start=0, step=1, limit=4
    $region2: #{tpu_custom_call.1} parent=1 // loop_pre_header
      _
    $region3: #{tpu_custom_call.1} parent=1 // loop_header
      %s16 = sphi 0, %s20
      %p17 = scmp.ge.s32.totalorder %s16, 4
      %s26 = sphi 0, %s28
      %s29 = sphi 0, %s26
      %s30 = sphi 0, %s29
      %s46 = sphi 0, %s30
      %s50 = sphi 0, %s50
      %s52 = sphi 0, %s50
      %s53 = sphi 0, %s52
      %s67 = sphi 0, %s53
      %s71 = sphi 0, %s71
      %s73 = sphi 0, %s71
      %s74 = sphi 0, %s73
      %s88 = sphi 0, %s74
      %s94 = sphi 0, %s96
      %s97 = sphi 0, %s94
      %s98 = sphi 0, %s97
      %s114 = sphi 0, %s98
    $region4: #{tpu_custom_call.1} parent=1 // loop_header_branch
      %19 = sbr.rel (%p17) target = $region8
    $region5: #{tpu_custom_call.1} parent=1 // loop_body
      %s21 = ssub.s32 %s16, 1
      %s22 = ssub.s32 %s16, 2
      %s23 = sadd.s32 %s16, 1
      %s24 = ssub.s32 %s16, %s23
      %p25 = scmp.eq.s32.totalorder %s24, 0
      %s27 = sadd.s32 %s26, 1
      %s28 = scalar_select %p25, %s26, %s27
      %p31 = pneg %p25
      %p32 = scmp.eq.s32.totalorder %s16, 1
      %p33 = por %p31, %p32
      %p34 = scmp.ne.s32.totalorder %s26, %s29
      %p35 = scmp.eq.s32.totalorder %s16, 0
      %p36 = por %p34, %p35
      %p37 = scmp.ne.s32.totalorder %s26, %s29
      %p38 = scmp.eq.s32.totalorder %s21, 1
      %p39 = por %p37, %p38
      %p40 = scmp.ne.s32.totalorder %s29, %s30
      %p41 = scmp.eq.s32.totalorder %s21, 0
      %p42 = por %p40, %p41
      %p43 = scmp.ne.s32.totalorder %s29, %s30
      %p44 = scmp.eq.s32.totalorder %s22, 1
      %p45 = por %p43, %p44
      %p47 = scmp.ne.s32.totalorder %s30, %s46
      %p48 = scmp.eq.s32.totalorder %s22, 0
      %p49 = por %p47, %p48
      %s51 = sadd.s32 %s50, 1
      %p54 = scmp.eq.s32.totalorder %s16, 1
      %p55 = scmp.ne.s32.totalorder %s50, %s52
      %p56 = scmp.eq.s32.totalorder %s16, 0
      %p57 = por %p55, %p56
      %p58 = scmp.ne.s32.totalorder %s50, %s52
      %p59 = scmp.eq.s32.totalorder %s21, 1
      %p60 = por %p58, %p59
      %p61 = scmp.ne.s32.totalorder %s52, %s53
      %p62 = scmp.eq.s32.totalorder %s21, 0
      %p63 = por %p61, %p62
      %p64 = scmp.ne.s32.totalorder %s52, %s53
      %p65 = scmp.eq.s32.totalorder %s22, 1
      %p66 = por %p64, %p65
      %p68 = scmp.ne.s32.totalorder %s53, %s67
      %p69 = scmp.eq.s32.totalorder %s22, 0
      %p70 = por %p68, %p69
      %s72 = sadd.s32 %s71, 1
      %p75 = scmp.eq.s32.totalorder %s16, 1
      %p76 = scmp.ne.s32.totalorder %s71, %s73
      %p77 = scmp.eq.s32.totalorder %s16, 0
      %p78 = por %p76, %p77
      %p79 = scmp.ne.s32.totalorder %s71, %s73
      %p80 = scmp.eq.s32.totalorder %s21, 1
      %p81 = por %p79, %p80
      %p82 = scmp.ne.s32.totalorder %s73, %s74
      %p83 = scmp.eq.s32.totalorder %s21, 0
      %p84 = por %p82, %p83
      %p85 = scmp.ne.s32.totalorder %s73, %s74
      %p86 = scmp.eq.s32.totalorder %s22, 1
      %p87 = por %p85, %p86
      %p89 = scmp.ne.s32.totalorder %s74, %s88
      %p90 = scmp.eq.s32.totalorder %s22, 0
      %p91 = por %p89, %p90
      %s92 = ssub.s32 %s16, %s23
      %p93 = scmp.eq.s32.totalorder %s92, 0
      %s95 = sadd.s32 %s94, 1
      %s96 = scalar_select %p93, %s94, %s95
      %p99 = pneg %p93
      %p100 = scmp.eq.s32.totalorder %s16, 1
      %p101 = por %p99, %p100
      %p102 = scmp.ne.s32.totalorder %s94, %s97
      %p103 = scmp.eq.s32.totalorder %s16, 0
      %p104 = por %p102, %p103
      %p105 = scmp.ne.s32.totalorder %s94, %s97
      %p106 = scmp.eq.s32.totalorder %s21, 1
      %p107 = por %p105, %p106
      %p108 = scmp.ne.s32.totalorder %s97, %s98
      %p109 = scmp.eq.s32.totalorder %s21, 0
      %p110 = por %p108, %p109
      %p111 = scmp.ne.s32.totalorder %s97, %s98
      %p112 = scmp.eq.s32.totalorder %s22, 1
      %p113 = por %p111, %p112
      %p115 = scmp.ne.s32.totalorder %s98, %s114
      %p116 = scmp.eq.s32.totalorder %s22, 0
      %p117 = por %p115, %p116
      %p118 = scmp.le.s32.totalorder 1, %s16
      %p119 = scmp.lt.s32.totalorder %s16, 3
      %p120 = pnand %p118, %p119
      %p121 = pneg %p120
      // Predicated region
      $region9: #{tpu_custom_call.1} parent=5 // pred_check
        _
      $region10: #{tpu_custom_call.1} parent=5 // pred_check_branch
        %123 = sbr.rel (%p120) target = $region12
      $region11: #{tpu_custom_call.1} parent=5 // pred_region
        %s124 = ssub.s32 %s16, 1
        // Predicated region
        $region13: #{tpu_custom_call.1} parent=11 // pred_check
          %p125 = pneg %p63
        $region14: #{tpu_custom_call.1} parent=11 // pred_check_branch
          %127 = sbr.rel (%p125) target = $region16
        $region15: #{tpu_custom_call.1} parent=11 // pred_region
          %129 = vsyncadd [#allocation6], 0
          %s131 = sshll.u32 %s1, 4
          %s132 = int_to_ptr.hbm [resolvable:$true] %s131
          %s133 = sshll.u32 [#allocation5], 4
          %s134 = int_to_ptr.vmem [resolvable:$true] %s133
          %136 = dma.hbm_to_vmem [thread:$0]  %s132, 16, %s134, [#allocation6]
        $region16: #{tpu_custom_call.1} parent=11 // pred_fallthru
          _
        // Predicated region
        $region17: #{tpu_custom_call.1} parent=11 // pred_check
          %p137 = pneg %p84
        $region18: #{tpu_custom_call.1} parent=11 // pred_check_branch
          %139 = sbr.rel (%p137) target = $region20
        $region19: #{tpu_custom_call.1} parent=11 // pred_region
          _
        $region20: #{tpu_custom_call.1} parent=11 // pred_fallthru
          _
      $region12: #{tpu_custom_call.1} parent=5 // pred_fallthru
        _
      %p140 = scmp.lt.s32.totalorder %s16, 2
      // Predicated region
      $region21: #{tpu_custom_call.1} parent=5 // pred_check
        %p141 = pneg %p140
      $region22: #{tpu_custom_call.1} parent=5 // pred_check_branch
        %143 = sbr.rel (%p141) target = $region24
      $region23: #{tpu_custom_call.1} parent=5 // pred_region
        // Predicated region
        $region25: #{tpu_custom_call.1} parent=23 // pred_check
          %p144 = pneg %p36
        $region26: #{tpu_custom_call.1} parent=23 // pred_check_branch
          %146 = sbr.rel (%p144) target = $region28
        $region27: #{tpu_custom_call.1} parent=23 // pred_region
          %s147 = sand.u32 %s26, 1
          %s148 = scalar_lea.sflag [#allocation3], %s147
          %s149 = sand.u32 %s26, 1
          %s150 = smul.addr %s149, 8
          %s151 = scalar_lea.vmem [#allocation2], %s150
          %153 = vsyncadd %s148, 0
          %s154 = smul.addr %s16, 8
          %s155 = scalar_lea.hbm %s0, %s154
          %s157 = sshll.u32 %s155, 4
          %s158 = int_to_ptr.hbm [resolvable:$true] %s157
          %s159 = sshll.u32 %s151, 4
          %s160 = int_to_ptr.vmem [resolvable:$true] %s159
          %162 = dma.hbm_to_vmem [thread:$0]  %s158, 128, %s160, %s148
        $region28: #{tpu_custom_call.1} parent=23 // pred_fallthru
          _
      $region24: #{tpu_custom_call.1} parent=5 // pred_fallthru
        _
      %p163 = scmp.le.s32.totalorder 1, %s16
      %p164 = scmp.lt.s32.totalorder %s16, 3
      %p165 = pnand %p163, %p164
      %p166 = pneg %p165
      // Predicated region
      $region29: #{tpu_custom_call.1} parent=5 // pred_check
        _
      $region30: #{tpu_custom_call.1} parent=5 // pred_check_branch
        %168 = sbr.rel (%p165) target = $region32
      $region31: #{tpu_custom_call.1} parent=5 // pred_region
        %s169 = ssub.s32 %s16, 1
        %s170 = sand.u32 %s29, 1
        %s171 = scalar_lea.sflag [#allocation3], %s170
        %s172 = sand.u32 %s29, 1
        %s173 = smul.addr %s172, 8
        %s174 = scalar_lea.vmem [#allocation2], %s173
        // Predicated region
        $region33: #{tpu_custom_call.1} parent=31 // pred_check
          %p175 = pneg %p42
        $region34: #{tpu_custom_call.1} parent=31 // pred_check_branch
          %177 = sbr.rel (%p175) target = $region36
        $region35: #{tpu_custom_call.1} parent=31 // pred_region
          %179 = dma.done %s171, 128
        $region36: #{tpu_custom_call.1} parent=31 // pred_fallthru
          _
        // Predicated region
        $region37: #{tpu_custom_call.1} parent=31 // pred_check
          %p180 = pneg %p63
        $region38: #{tpu_custom_call.1} parent=31 // pred_check_branch
          %182 = sbr.rel (%p180) target = $region40
        $region39: #{tpu_custom_call.1} parent=31 // pred_region
          %184 = dma.done [#allocation6], 16
        $region40: #{tpu_custom_call.1} parent=31 // pred_fallthru
          _
        %s185 = sand.u32 %s29, 1
        %s186 = scalar_lea.sflag [#allocation3], %s185
        %s187 = sand.u32 %s29, 1
        %s188 = smul.addr %s187, 8
        %s189 = scalar_lea.vmem [#allocation2], %s188
        %p190 = pneg %p42
        %p191 = pneg %p39
        %p192 = pneg %p63
        %p193 = pneg %p60
        %p194 = pneg %p84
        %p195 = pneg %p81
        %p196 = pneg %p110
        %p197 = pneg %p107
        %s198 = sand.u32 %s97, 1
        %s199 = scalar_lea.sflag [#allocation4], %s198
        %s200 = sand.u32 %s97, 1
        %s201 = smul.addr %s200, 4
        %s202 = scalar_lea.vmem [#allocation7], %s201
        %v203 = vld [vmem:[%s174] sm:$0xff]
        %vm204 = vcmask 261120
        %v205 = vsel %vm204, %v203, 0.0
        %206 = vadd.xlane.f32.xlu0 %v205
        %v207 = vpop.xlane.xlu0 %206
        %v208 = vrcp.pop 32.0
        %v209 = vmul.f32 32.0, %v208
        %v210 = vsub.f32 1.0, %v209
        %v211 = vmul.f32 %v208, %v210
        %v212 = vadd.f32 %v208, %v211
        %vm213 = vweird.f32 %v208
        %v214 = vsel %vm213, %v208, %v212
        %v215 = vmul.f32 %v207, %v214
        %v216 = vsub.f32 %v203, %v215
        %v217 = vmul.f32 %v216, %v216
        %v218 = vsel %vm204, %v217, 0.0
        %219 = vadd.xlane.f32.xlu0 %v218
        %v220 = vpop.xlane.xlu0 %219
        %v221 = vmul.f32 %v220, %v214
        %v222 = vadd.f32 %v221, 1e-05
        %v223 = vrsqrt.pop %v222
        %v224 = vmul.f32 %v223, %v222
        %v225 = vmul.f32 %v224, %v223
        %v226 = vmul.f32 0.5, %v225
        %v227 = vsub.f32 1.5, %v226
        %v228 = vmul.f32 %v223, %v227
        %vm229 = vweird.f32 %v222
        %vm230 = vweird.f32 %v223
        %vm231 = vmor %vm229, %vm230
        %v232 = vsel %vm231, %v223, %v228
        %v233 = vmul.f32 %v216, %v232
        %v234 = vld [vmem:[#allocation5] sm:$0x1]
        %v236 = vperm.slane %v234, 0
        %v238 = vmul.f32 %v233, %v236
        %v239 = vld [vmem:[%s2] sm:$0x1]
        %v241 = vperm.slane %v239, 0
        %v243 = vadd.f32 %v238, %v241
        %v244 = vpack.c.bf16 %v243, %v243
        %vm245 = vcmask 257024
        %246 = vst.msk [vmem:[%s202] sm:$0xf] %vm245, %v244
        %s247 = sand.u32 %s97, 1
        %s248 = scalar_lea.sflag [#allocation4], %s247
        %s249 = sand.u32 %s97, 1
        %s250 = smul.addr %s249, 4
        %s251 = scalar_lea.vmem [#allocation7], %s250
        // Predicated region
        $region41: #{tpu_custom_call.1} parent=31 // pred_check
          %p252 = pneg %p107
        $region42: #{tpu_custom_call.1} parent=31 // pred_check_branch
          %254 = sbr.rel (%p252) target = $region44
        $region43: #{tpu_custom_call.1} parent=31 // pred_region
          %256 = vsyncadd %s248, 0
          %s257 = smul.addr %s21, 4
          %s258 = scalar_lea.hbm %s3, %s257
          %s260 = sshll.u32 %s251, 4
          %s261 = int_to_ptr.vmem [resolvable:$true] %s260
          %s262 = sshll.u32 %s258, 4
          %s263 = int_to_ptr.hbm [resolvable:$true] %s262
          %265 = dma.vmem_to_hbm [thread:$0]  %s261, 64, %s263, %s248
        $region44: #{tpu_custom_call.1} parent=31 // pred_fallthru
          _
      $region32: #{tpu_custom_call.1} parent=5 // pred_fallthru
        _
      %p266 = scmp.le.s32.totalorder 2, %s16
      // Predicated region
      $region45: #{tpu_custom_call.1} parent=5 // pred_check
        %p267 = pneg %p266
      $region46: #{tpu_custom_call.1} parent=5 // pred_check_branch
        %269 = sbr.rel (%p267) target = $region48
      $region47: #{tpu_custom_call.1} parent=5 // pred_region
        %s270 = ssub.s32 %s16, 2
        // Predicated region
        $region49: #{tpu_custom_call.1} parent=47 // pred_check
          %p271 = pneg %p113
        $region50: #{tpu_custom_call.1} parent=47 // pred_check_branch
          %273 = sbr.rel (%p271) target = $region52
        $region51: #{tpu_custom_call.1} parent=47 // pred_region
          %s274 = sand.u32 %s98, 1
          %s275 = scalar_lea.sflag [#allocation4], %s274
          %s276 = sand.u32 %s98, 1
          %s277 = smul.addr %s276, 4
          %s278 = scalar_lea.vmem [#allocation7], %s277
          %280 = dma.done %s275, 64
        $region52: #{tpu_custom_call.1} parent=47 // pred_fallthru
          _
      $region48: #{tpu_custom_call.1} parent=5 // pred_fallthru
        _
    $region6: #{tpu_custom_call.1} parent=1 // loop_footer
      %s20 = sadd.s32 1, %s16
    $region7: #{tpu_custom_call.1} parent=1 // loop_footer_branch
      %15 = sbr.rel target = $region3
    $region8: #{tpu_custom_call.1} parent=1 // loop_exit
      _
    %281 = vsyncpa [#allocation3], 1
    %s282 = scalar_lea.sflag [#allocation3], 1
    %283 = vsyncpa %s282, 1
    %284 = vsyncpa [#allocation6], 1
    %285 = vsyncpa [#allocation4], 1
    %s286 = scalar_lea.sflag [#allocation4], 1
    %287 = vsyncpa %s286, 1

</llo_original>
